<compile_context>
chip_gen: v7x
topology: tpu7x:2x2x1
jax: 0.10.0
libtpu: 0.0.40
codegen_flags: <defaults>
</compile_context>

<pallas_src>
import jax
import jax.numpy as jnp
from jax.experimental import pallas as pl
from jax.experimental.pallas import tpu as pltpu


def _round_up(x, m):
    return ((x + m - 1) // m) * m


def _pad_to(arr, shape):
    pads = [(0, s - d) for d, s in zip(arr.shape, shape)]
    return jnp.pad(arr, pads)


def _make_mlp_kernel(num_layers):
    """Fused MLP kernel: num_layers linear layers, ReLU after all but the last."""

    def kernel(*refs):
        x_ref = refs[0]
        out_ref = refs[-1]
        param_refs = refs[1:-1]  # interleaved: w0, b0, w1, b1, ...
        h = x_ref[...]  # f32 row tile (TM, F)
        for i in range(num_layers):
            w = param_refs[2 * i][...]        # bf16 (or f32) weight, VMEM-resident
            b = param_refs[2 * i + 1][...]    # f32 bias (1, out_pad)
            # bf16 inputs to the MXU, f32 accumulation; bias-add / ReLU stay in f32.
            h = jnp.dot(h.astype(w.dtype), w, preferred_element_type=jnp.float32) + b
            if i < num_layers - 1:
                # ReLU after every layer except the final fc.  (The extra nn.ReLU() after
                # `head` in the PyTorch forward is a no-op because head already ends with
                # ReLU; semantics are preserved.)
                h = jnp.maximum(h, 0.0)
        out_ref[...] = h  # already f32, lane-dense (TM, out_pad)

    return kernel


def custom_relu_net_forward(x, weights, biases, *, tile_m=512, use_bf16=True):
    """x: (B, S, F). weights[i]: (in_i, out_i) f32. biases[i]: (1, out_i) f32.

    Returns (B, S, out_last) f32.
    """
    B, S, F = x.shape
    N = B * S
    x2 = x.reshape(N, F).astype(jnp.float32)
    num_layers = len(weights)
    out_dim = weights[-1].shape[1]

    # ---- lane-dense padding of every layer's output dim to a multiple of 128 ----
    padded_out = [_round_up(w.shape[1], 128) for w in weights]
    padded_in = [F] + padded_out[:-1]

    weights_p, biases_p = [], []
    for i, (w, b) in enumerate(zip(weights, biases)):
        wp = _pad_to(w.astype(jnp.float32), (padded_in[i], padded_out[i]))
        bp = _pad_to(b.astype(jnp.float32).reshape(1, -1), (1, padded_out[i]))
        if use_bf16:
            wp = wp.astype(jnp.bfloat16)
        weights_p.append(wp)
        biases_p.append(bp)
    out_pad = padded_out[-1]

    # ---- row tiling ----
    # TM multiple of 8 when it tiles N; if N fits in one tile use the full dim (always legal).
    TM = tile_m if N > tile_m else N
    num_tiles = pl.cdiv(N, TM)

    kernel = _make_mlp_kernel(num_layers)

    in_specs = [pl.BlockSpec((TM, F), lambda i: (i, 0))]
    operands = [x2]
    for w, b in zip(weights_p, biases_p):
        in_specs.append(pl.BlockSpec(w.shape, lambda i: (0, 0)))  # params VMEM-resident
        in_specs.append(pl.BlockSpec(b.shape, lambda i: (0, 0)))
        operands.append(w)
        operands.append(b)

    # ---- cost estimate & VMEM budget ----
    flops = 2 * N * sum(pi * po for pi, po in zip(padded_in, padded_out))
    param_bytes = sum(int(w.size) * w.dtype.itemsize for w in weights_p) + sum(
        int(b.size) * 4 for b in biases_p
    )
    bytes_accessed = x2.size * 4 + N * out_dim * 4 + param_bytes
    max_width = max(padded_out)
    vmem_needed = (
        param_bytes
        + 2 * (TM * F * 4 + TM * out_pad * 4)  # double-buffered in/out row tiles
        + 2 * TM * max_width * 4               # largest f32 intermediate + headroom
    )
    vmem_limit = int(min(max(2 * vmem_needed, 32 * 1024 * 1024), 64 * 1024 * 1024))

    out_padded = pl.pallas_call(
        kernel,
        out_shape=jax.ShapeDtypeStruct((N, out_pad), jnp.float32),
        grid=(num_tiles,),
        in_specs=in_specs,
        out_specs=pl.BlockSpec((TM, out_pad), lambda i: (i, 0)),
        compiler_params=pltpu.CompilerParams(
            dimension_semantics=("parallel",),  # row tiles are independent (megacore on v7x)
            vmem_limit_bytes=vmem_limit,
        ),
        cost_estimate=pl.CostEstimate(
            flops=flops, transcendentals=0, bytes_accessed=bytes_accessed
        ),
    )(*operands)

    return out_padded[:, :out_dim].reshape(B, S, out_dim)


def init_params(key, input_size, hidden_size, output_size, hidden_layers, output_layers):
    """Deterministic parameter init mirroring CustomReLUNet.__init__ layer structure."""
    # head:  input_size -> hidden_layers... -> hidden_size   (ReLU after each)
    # tail:  hidden_size -> output_layers...                  (ReLU after each)
    # fc:    last -> output_size                               (no ReLU)
    dims = [input_size] + list(hidden_layers) + [hidden_size] + list(output_layers) + [output_size]
    weights, biases = [], []
    for i in range(len(dims) - 1):
        d_in, d_out = dims[i], dims[i + 1]
        key, kw, kb = jax.random.split(key, 3)
        stdev = (2.0 / d_in) ** 0.5
        w = stdev * jax.random.normal(kw, (d_in, d_out), dtype=jnp.float32)  # PyTorch W.T
        bound = 1.0 / (d_in ** 0.5)  # PyTorch default Linear bias init range
        b = jax.random.uniform(kb, (1, d_out), dtype=jnp.float32, minval=-bound, maxval=bound)
        weights.append(w)
        biases.append(b)
    return weights, biases


def reference_forward(x, weights, biases, use_bf16=True):
    """Pure-JAX reference reproducing the PyTorch forward (per-timestep loop).

    Applies the same bf16-at-matmul rounding as the kernel (f32 accumulate) so the
    tolerance check isolates kernel correctness from dtype policy.
    """
    B, S, F = x.shape
    n = len(weights)
    outs = []
    for t in range(S):
        h = x[:, t, :]
        for i in range(n):
            if use_bf16:
                w = weights[i].astype(jnp.bfloat16).astype(jnp.float32)
                hh = h.astype(jnp.bfloat16).astype(jnp.float32)
            else:
                w, hh = weights[i], h
            h = hh @ w + biases[i]
            if i < n - 1:
                h = jnp.maximum(h, 0.0)
        outs.append(h[:, None, :])
    return jnp.concatenate(outs, axis=1)


if __name__ == "__main__":
    # Small shapes consistent with the module's forward: (batch, seq, input_size)
    batch, seq = 2, 8
    input_size = 16
    hidden_size = 32
    output_size = 8
    hidden_layers = [32, 32]
    output_layers = [32]

    key = jax.random.PRNGKey(0)
    key, kx = jax.random.split(key)
    x = jax.random.normal(kx, (batch, seq, input_size), dtype=jnp.float32)

    weights, biases = init_params(
        key, input_size, hidden_size, output_size, hidden_layers, output_layers
    )

    out = custom_relu_net_forward(x, weights, biases, tile_m=512, use_bf16=True)
    out = jax.block_until_ready(out)

    ref = reference_forward(x, weights, biases, use_bf16=True)
    assert out.shape == (batch, seq, output_size), out.shape
    err = float(jnp.max(jnp.abs(out - ref)))
    assert jnp.allclose(out, ref, atol=2e-3, rtol=2e-3), err

    print("KERNEL_OK")
</pallas_src>

<mosaic_0001>
module attributes {stable_mosaic.version = 11 : i64} {
  func.func @kernel(%arg0: i32, %arg1: memref<16x16xf32, #tpu.memory_space<vmem>>, %arg2: memref<16x128xbf16, #tpu.memory_space<vmem>>, %arg3: memref<1x128xf32, #tpu.memory_space<vmem>>, %arg4: memref<128x128xbf16, #tpu.memory_space<vmem>>, %arg5: memref<1x128xf32, #tpu.memory_space<vmem>>, %arg6: memref<128x128xbf16, #tpu.memory_space<vmem>>, %arg7: memref<1x128xf32, #tpu.memory_space<vmem>>, %arg8: memref<128x128xbf16, #tpu.memory_space<vmem>>, %arg9: memref<1x128xf32, #tpu.memory_space<vmem>>, %arg10: memref<128x128xbf16, #tpu.memory_space<vmem>>, %arg11: memref<1x128xf32, #tpu.memory_space<vmem>>, %arg12: memref<16x128xf32, #tpu.memory_space<vmem>>) attributes {dimension_semantics = [#tpu.dimension_semantics<parallel>], iteration_bounds = array<i64: 1>, scalar_prefetch = 0 : i64, scratch_operands = 0 : i64, tpu.core_type = #tpu.core_type<tc>, window_params = [{transform_indices = @transform_0, window_bounds = array<i64: 16, 16>}, {pipeline_mode = #tpu.pipeline_mode<synchronous>, transform_indices = @transform_1, window_bounds = array<i64: 16, 128>}, {pipeline_mode = #tpu.pipeline_mode<synchronous>, transform_indices = @transform_2, window_bounds = array<i64: 1, 128>}, {pipeline_mode = #tpu.pipeline_mode<synchronous>, transform_indices = @transform_3, window_bounds = array<i64: 128, 128>}, {pipeline_mode = #tpu.pipeline_mode<synchronous>, transform_indices = @transform_4, window_bounds = array<i64: 1, 128>}, {pipeline_mode = #tpu.pipeline_mode<synchronous>, transform_indices = @transform_5, window_bounds = array<i64: 128, 128>}, {pipeline_mode = #tpu.pipeline_mode<synchronous>, transform_indices = @transform_6, window_bounds = array<i64: 1, 128>}, {pipeline_mode = #tpu.pipeline_mode<synchronous>, transform_indices = @transform_7, window_bounds = array<i64: 128, 128>}, {pipeline_mode = #tpu.pipeline_mode<synchronous>, transform_indices = @transform_8, window_bounds = array<i64: 1, 128>}, {pipeline_mode = #tpu.pipeline_mode<synchronous>, transform_indices = @transform_9, window_bounds = array<i64: 128, 128>}, {pipeline_mode = #tpu.pipeline_mode<synchronous>, transform_indices = @transform_10, window_bounds = array<i64: 1, 128>}, {transform_indices = @transform_11, window_bounds = array<i64: 16, 128>}]} {
    %c0 = arith.constant 0 : index
    %c0_0 = arith.constant 0 : index
    %0 = vector.load %arg1[%c0, %c0_0] : memref<16x16xf32, #tpu.memory_space<vmem>>, vector<16x16xf32>
    %c0_1 = arith.constant 0 : index
    %c0_2 = arith.constant 0 : index
    %1 = vector.load %arg2[%c0_1, %c0_2] : memref<16x128xbf16, #tpu.memory_space<vmem>>, vector<16x128xbf16>
    %c0_3 = arith.constant 0 : index
    %c0_4 = arith.constant 0 : index
    %2 = vector.load %arg3[%c0_3, %c0_4] : memref<1x128xf32, #tpu.memory_space<vmem>>, vector<1x128xf32>
    %3 = arith.truncf %0 : vector<16x16xf32> to vector<16x16xbf16>
    %cst = arith.constant dense<0.000000e+00> : vector<16x128xf32>
    %4 = tpu.matmul %3, %1, %cst {dimension_numbers = #tpu.dot_dimension_numbers<[1], [0], [0], [1], [0, 0, 1, 1], [], []>} : vector<16x16xbf16>, vector<16x128xbf16>, vector<16x128xf32> -> vector<16x128xf32>
    %5 = vector.broadcast %2 : vector<1x128xf32> to vector<16x128xf32>
    %6 = arith.addf %4, %5 : vector<16x128xf32>
    %cst_5 = arith.constant 0.000000e+00 : f32
    %7 = vector.broadcast %cst_5 : f32 to vector<16x128xf32>
    %8 = arith.maximumf %6, %7 : vector<16x128xf32>
    %c0_6 = arith.constant 0 : index
    %c0_7 = arith.constant 0 : index
    %9 = vector.load %arg4[%c0_6, %c0_7] : memref<128x128xbf16, #tpu.memory_space<vmem>>, vector<128x128xbf16>
    %c0_8 = arith.constant 0 : index
    %c0_9 = arith.constant 0 : index
    %10 = vector.load %arg5[%c0_8, %c0_9] : memref<1x128xf32, #tpu.memory_space<vmem>>, vector<1x128xf32>
    %11 = arith.truncf %8 : vector<16x128xf32> to vector<16x128xbf16>
    %cst_10 = arith.constant dense<0.000000e+00> : vector<16x128xf32>
    %12 = tpu.matmul %11, %9, %cst_10 {dimension_numbers = #tpu.dot_dimension_numbers<[1], [0], [0], [1], [0, 0, 1, 1], [], []>} : vector<16x128xbf16>, vector<128x128xbf16>, vector<16x128xf32> -> vector<16x128xf32>
    %13 = vector.broadcast %10 : vector<1x128xf32> to vector<16x128xf32>
    %14 = arith.addf %12, %13 : vector<16x128xf32>
    %cst_11 = arith.constant 0.000000e+00 : f32
    %15 = vector.broadcast %cst_11 : f32 to vector<16x128xf32>
    %16 = arith.maximumf %14, %15 : vector<16x128xf32>
    %c0_12 = arith.constant 0 : index
    %c0_13 = arith.constant 0 : index
    %17 = vector.load %arg6[%c0_12, %c0_13] : memref<128x128xbf16, #tpu.memory_space<vmem>>, vector<128x128xbf16>
    %c0_14 = arith.constant 0 : index
    %c0_15 = arith.constant 0 : index
    %18 = vector.load %arg7[%c0_14, %c0_15] : memref<1x128xf32, #tpu.memory_space<vmem>>, vector<1x128xf32>
    %19 = arith.truncf %16 : vector<16x128xf32> to vector<16x128xbf16>
    %cst_16 = arith.constant dense<0.000000e+00> : vector<16x128xf32>
    %20 = tpu.matmul %19, %17, %cst_16 {dimension_numbers = #tpu.dot_dimension_numbers<[1], [0], [0], [1], [0, 0, 1, 1], [], []>} : vector<16x128xbf16>, vector<128x128xbf16>, vector<16x128xf32> -> vector<16x128xf32>
    %21 = vector.broadcast %18 : vector<1x128xf32> to vector<16x128xf32>
    %22 = arith.addf %20, %21 : vector<16x128xf32>
    %cst_17 = arith.constant 0.000000e+00 : f32
    %23 = vector.broadcast %cst_17 : f32 to vector<16x128xf32>
    %24 = arith.maximumf %22, %23 : vector<16x128xf32>
    %c0_18 = arith.constant 0 : index
    %c0_19 = arith.constant 0 : index
    %25 = vector.load %arg8[%c0_18, %c0_19] : memref<128x128xbf16, #tpu.memory_space<vmem>>, vector<128x128xbf16>
    %c0_20 = arith.constant 0 : index
    %c0_21 = arith.constant 0 : index
    %26 = vector.load %arg9[%c0_20, %c0_21] : memref<1x128xf32, #tpu.memory_space<vmem>>, vector<1x128xf32>
    %27 = arith.truncf %24 : vector<16x128xf32> to vector<16x128xbf16>
    %cst_22 = arith.constant dense<0.000000e+00> : vector<16x128xf32>
    %28 = tpu.matmul %27, %25, %cst_22 {dimension_numbers = #tpu.dot_dimension_numbers<[1], [0], [0], [1], [0, 0, 1, 1], [], []>} : vector<16x128xbf16>, vector<128x128xbf16>, vector<16x128xf32> -> vector<16x128xf32>
    %29 = vector.broadcast %26 : vector<1x128xf32> to vector<16x128xf32>
    %30 = arith.addf %28, %29 : vector<16x128xf32>
    %cst_23 = arith.constant 0.000000e+00 : f32
    %31 = vector.broadcast %cst_23 : f32 to vector<16x128xf32>
    %32 = arith.maximumf %30, %31 : vector<16x128xf32>
    %c0_24 = arith.constant 0 : index
    %c0_25 = arith.constant 0 : index
    %33 = vector.load %arg10[%c0_24, %c0_25] : memref<128x128xbf16, #tpu.memory_space<vmem>>, vector<128x128xbf16>
    %c0_26 = arith.constant 0 : index
    %c0_27 = arith.constant 0 : index
    %34 = vector.load %arg11[%c0_26, %c0_27] : memref<1x128xf32, #tpu.memory_space<vmem>>, vector<1x128xf32>
    %35 = arith.truncf %32 : vector<16x128xf32> to vector<16x128xbf16>
    %cst_28 = arith.constant dense<0.000000e+00> : vector<16x128xf32>
    %36 = tpu.matmul %35, %33, %cst_28 {dimension_numbers = #tpu.dot_dimension_numbers<[1], [0], [0], [1], [0, 0, 1, 1], [], []>} : vector<16x128xbf16>, vector<128x128xbf16>, vector<16x128xf32> -> vector<16x128xf32>
    %37 = vector.broadcast %34 : vector<1x128xf32> to vector<16x128xf32>
    %38 = arith.addf %36, %37 : vector<16x128xf32>
    %c0_29 = arith.constant 0 : index
    %c0_30 = arith.constant 0 : index
    %39 = vector.load %arg12[%c0_29, %c0_30] : memref<16x128xf32, #tpu.memory_space<vmem>>, vector<16x128xf32>
    tpu.vector_store %arg12[%c0_29, %c0_30], %38 {strides = array<i32>} : memref<16x128xf32, #tpu.memory_space<vmem>>, vector<16x128xf32>,
    return
  }
  func.func @transform_0(%arg0: i32) -> (i32, i32) {
    %c0_i32 = arith.constant 0 : i32
    %c0_i32_0 = arith.constant 0 : i32
    return %arg0, %c0_i32 : i32, i32
  }
  func.func @transform_1(%arg0: i32) -> (i32, i32) {
    %c0_i32 = arith.constant 0 : i32
    %c0_i32_0 = arith.constant 0 : i32
    %c0_i32_1 = arith.constant 0 : i32
    return %c0_i32, %c0_i32_0 : i32, i32
  }
  func.func @transform_2(%arg0: i32) -> (i32, i32) {
    %c0_i32 = arith.constant 0 : i32
    %c0_i32_0 = arith.constant 0 : i32
    %c0_i32_1 = arith.constant 0 : i32
    return %c0_i32, %c0_i32_0 : i32, i32
  }
  func.func @transform_3(%arg0: i32) -> (i32, i32) {
    %c0_i32 = arith.constant 0 : i32
    %c0_i32_0 = arith.constant 0 : i32
    %c0_i32_1 = arith.constant 0 : i32
    return %c0_i32, %c0_i32_0 : i32, i32
  }
  func.func @transform_4(%arg0: i32) -> (i32, i32) {
    %c0_i32 = arith.constant 0 : i32
    %c0_i32_0 = arith.constant 0 : i32
    %c0_i32_1 = arith.constant 0 : i32
    return %c0_i32, %c0_i32_0 : i32, i32
  }
  func.func @transform_5(%arg0: i32) -> (i32, i32) {
    %c0_i32 = arith.constant 0 : i32
    %c0_i32_0 = arith.constant 0 : i32
    %c0_i32_1 = arith.constant 0 : i32
    return %c0_i32, %c0_i32_0 : i32, i32
  }
  func.func @transform_6(%arg0: i32) -> (i32, i32) {
    %c0_i32 = arith.constant 0 : i32
    %c0_i32_0 = arith.constant 0 : i32
    %c0_i32_1 = arith.constant 0 : i32
    return %c0_i32, %c0_i32_0 : i32, i32
  }
  func.func @transform_7(%arg0: i32) -> (i32, i32) {
    %c0_i32 = arith.constant 0 : i32
    %c0_i32_0 = arith.constant 0 : i32
    %c0_i32_1 = arith.constant 0 : i32
    return %c0_i32, %c0_i32_0 : i32, i32
  }
  func.func @transform_8(%arg0: i32) -> (i32, i32) {
    %c0_i32 = arith.constant 0 : i32
    %c0_i32_0 = arith.constant 0 : i32
    %c0_i32_1 = arith.constant 0 : i32
    return %c0_i32, %c0_i32_0 : i32, i32
  }
  func.func @transform_9(%arg0: i32) -> (i32, i32) {
    %c0_i32 = arith.constant 0 : i32
    %c0_i32_0 = arith.constant 0 : i32
    %c0_i32_1 = arith.constant 0 : i32
    return %c0_i32, %c0_i32_0 : i32, i32
  }
  func.func @transform_10(%arg0: i32) -> (i32, i32) {
    %c0_i32 = arith.constant 0 : i32
    %c0_i32_0 = arith.constant 0 : i32
    %c0_i32_1 = arith.constant 0 : i32
    return %c0_i32, %c0_i32_0 : i32, i32
  }
  func.func @transform_11(%arg0: i32) -> (i32, i32) {
    %c0_i32 = arith.constant 0 : i32
    %c0_i32_0 = arith.constant 0 : i32
    return %arg0, %c0_i32 : i32, i32
  }
}

</mosaic_0001>

<llo_original>
// kernel: tpu_custom_call.1
$region0: #{tpu_custom_call.1}
  #allocation0 [shape = 'u32[]', space=smem, size = 0x4, offset = 0x4, fixed_abs, tag = 'smem constant byte address 0x4 - core index']
  #allocation1 [shape = 'u32[144,128]{1,0:T(1,128)}', space=vmem, size = 0x12000, scoped, tag = 'internal scratch']
  %s0 = inlined_call_operand.hbm [shape: f32[16,16], index: 0, kind: input, shape index: {}]
  %s1 = inlined_call_operand.hbm [shape: bf16[16,128], index: 1, kind: input, shape index: {}]
  %s2 = inlined_call_operand.vmem [shape: f32[1,128], index: 2, kind: input, shape index: {}]
  %s3 = inlined_call_operand.hbm [shape: bf16[128,128], index: 3, kind: input, shape index: {}]
  %s4 = inlined_call_operand.vmem [shape: f32[1,128], index: 4, kind: input, shape index: {}]
  %s5 = inlined_call_operand.hbm [shape: bf16[128,128], index: 5, kind: input, shape index: {}]
  %s6 = inlined_call_operand.vmem [shape: f32[1,128], index: 6, kind: input, shape index: {}]
  %s7 = inlined_call_operand.hbm [shape: bf16[128,128], index: 7, kind: input, shape index: {}]
  %s8 = inlined_call_operand.vmem [shape: f32[1,128], index: 8, kind: input, shape index: {}]
  %s9 = inlined_call_operand.hbm [shape: bf16[128,128], index: 9, kind: input, shape index: {}]
  %s10 = inlined_call_operand.vmem [shape: f32[1,128], index: 10, kind: input, shape index: {}]
  %s11 = inlined_call_operand.hbm [shape: f32[16,128], index: 11, kind: output, shape index: {}]
  %s12 = sld [smem:[#allocation0]]
  $region78: #{tpu_custom_call.1} parent=0
    _
  %s14 = ssub.s32 1, %s12
  %s15 = scalar_select 0, %s14, %s12
  $region1: #{tpu_custom_call.1} parent=0
    #allocation2 [shape = 'u8[8192]{0}', space=vmem, size = 0x2000, scoped, tag = 'input window, operand 0, single buffered']
    #allocation3 [shape = 's32[1]{0}', space=sflag, size = 0x4, scoped, tag = 'scoped memory for tpu_custom_call.1']
    #allocation4 [shape = 's32[1]{0}', space=sflag, size = 0x4, scoped, tag = 'scoped memory for tpu_custom_call.1']
    #allocation5 [shape = 'u8[4096]{0}', space=vmem, size = 0x1000, scoped, tag = 'input window, operand 1, single buffered']
    #allocation6 [shape = 's32[1]{0}', space=sflag, size = 0x4, scoped, tag = 'scoped memory for tpu_custom_call.1']
    #allocation7 [shape = 'u8[32768]{0}', space=vmem, size = 0x8000, scoped, tag = 'input window, operand 3, single buffered']
    #allocation8 [shape = 'u8[32768]{0}', space=vmem, size = 0x8000, scoped, tag = 'input window, operand 5, single buffered']
    #allocation9 [shape = 's32[1]{0}', space=sflag, size = 0x4, scoped, tag = 'scoped memory for tpu_custom_call.1']
    #allocation10 [shape = 'u8[32768]{0}', space=vmem, size = 0x8000, scoped, tag = 'input window, operand 7, single buffered']
    #allocation11 [shape = 'u8[32768]{0}', space=vmem, size = 0x8000, scoped, tag = 'input window, operand 9, single buffered']
    #allocation12 [shape = 's32[1]{0}', space=sflag, size = 0x4, scoped, tag = 'scoped memory for tpu_custom_call.1']
    #allocation13 [shape = 'u8[8192]{0}', space=vmem, size = 0x2000, scoped, tag = 'output window, operand 0, single buffered']
    %16 = vsyncpa [#allocation3], 0
    %17 = vsyncpa [#allocation6], 0
    %18 = vsyncpa [#allocation9], 0
    %19 = vsyncpa [#allocation12], 0
    %20 = vsyncpa [#allocation4], 0
    // Predicated region
    $region2: #{tpu_custom_call.1} parent=1 // pred_check
      _
    $region3: #{tpu_custom_call.1} parent=1 // pred_check_branch
      %22 = sbr.rel (0) target = $region5
    $region4: #{tpu_custom_call.1} parent=1 // pred_region
      %s24 = ssub.s32 256, 256
      %25 = vsyncadd [#allocation3], %s24
      %s26 = sshll.u32 [#allocation2], 4
      %s27 = int_to_ptr.vmem [resolvable:$true] %s26
      %32 = dma.hbm_to_vmem [thread:$0]  %s0, 256, %s27, [#allocation3], 128, 128, 8
    $region5: #{tpu_custom_call.1} parent=1 // pred_fallthru
      _
    // Predicated region
    $region6: #{tpu_custom_call.1} parent=1 // pred_check
      _
    $region7: #{tpu_custom_call.1} parent=1 // pred_check_branch
      %34 = sbr.rel (0) target = $region9
    $region8: #{tpu_custom_call.1} parent=1 // pred_region
      %s36 = ssub.s32 128, 128
      %37 = vsyncadd [#allocation6], %s36
      %s38 = sshll.u32 [#allocation5], 4
      %s39 = int_to_ptr.vmem [resolvable:$true] %s38
      %44 = dma.hbm_to_vmem [thread:$0]  %s1, 128, %s39, [#allocation6], 64, 64, 4
    $region9: #{tpu_custom_call.1} parent=1 // pred_fallthru
      _
    // Predicated region
    $region10: #{tpu_custom_call.1} parent=1 // pred_check
      _
    $region11: #{tpu_custom_call.1} parent=1 // pred_check_branch
      %46 = sbr.rel (0) target = $region13
    $region12: #{tpu_custom_call.1} parent=1 // pred_region
      _
    $region13: #{tpu_custom_call.1} parent=1 // pred_fallthru
      _
    // Predicated region
    $region14: #{tpu_custom_call.1} parent=1 // pred_check
      _
    $region15: #{tpu_custom_call.1} parent=1 // pred_check_branch
      %48 = sbr.rel (0) target = $region17
    $region16: #{tpu_custom_call.1} parent=1 // pred_region
      %s50 = ssub.s32 1024, 1024
      %51 = vsyncadd [#allocation6], %s50
      %s52 = sshll.u32 [#allocation7], 4
      %s53 = int_to_ptr.vmem [resolvable:$true] %s52
      %58 = dma.hbm_to_vmem [thread:$0]  %s3, 1024, %s53, [#allocation6], 64, 64, 4
    $region17: #{tpu_custom_call.1} parent=1 // pred_fallthru
      _
    // Predicated region
    $region18: #{tpu_custom_call.1} parent=1 // pred_check
      _
    $region19: #{tpu_custom_call.1} parent=1 // pred_check_branch
      %60 = sbr.rel (0) target = $region21
    $region20: #{tpu_custom_call.1} parent=1 // pred_region
      _
    $region21: #{tpu_custom_call.1} parent=1 // pred_fallthru
      _
    // Predicated region
    $region22: #{tpu_custom_call.1} parent=1 // pred_check
      _
    $region23: #{tpu_custom_call.1} parent=1 // pred_check_branch
      %62 = sbr.rel (0) target = $region25
    $region24: #{tpu_custom_call.1} parent=1 // pred_region
      %s64 = ssub.s32 1024, 1024
      %65 = vsyncadd [#allocation9], %s64
      %s66 = sshll.u32 [#allocation8], 4
      %s67 = int_to_ptr.vmem [resolvable:$true] %s66
      %72 = dma.hbm_to_vmem [thread:$0]  %s5, 1024, %s67, [#allocation9], 64, 64, 4
    $region25: #{tpu_custom_call.1} parent=1 // pred_fallthru
      _
    // Predicated region
    $region26: #{tpu_custom_call.1} parent=1 // pred_check
      _
    $region27: #{tpu_custom_call.1} parent=1 // pred_check_branch
      %74 = sbr.rel (0) target = $region29
    $region28: #{tpu_custom_call.1} parent=1 // pred_region
      _
    $region29: #{tpu_custom_call.1} parent=1 // pred_fallthru
      _
    // Predicated region
    $region30: #{tpu_custom_call.1} parent=1 // pred_check
      _
    $region31: #{tpu_custom_call.1} parent=1 // pred_check_branch
      %76 = sbr.rel (0) target = $region33
    $region32: #{tpu_custom_call.1} parent=1 // pred_region
      %s78 = ssub.s32 1024, 1024
      %79 = vsyncadd [#allocation9], %s78
      %s80 = sshll.u32 [#allocation10], 4
      %s81 = int_to_ptr.vmem [resolvable:$true] %s80
      %86 = dma.hbm_to_vmem [thread:$0]  %s7, 1024, %s81, [#allocation9], 64, 64, 4
    $region33: #{tpu_custom_call.1} parent=1 // pred_fallthru
      _
    // Predicated region
    $region34: #{tpu_custom_call.1} parent=1 // pred_check
      _
    $region35: #{tpu_custom_call.1} parent=1 // pred_check_branch
      %88 = sbr.rel (0) target = $region37
    $region36: #{tpu_custom_call.1} parent=1 // pred_region
      _
    $region37: #{tpu_custom_call.1} parent=1 // pred_fallthru
      _
    // Predicated region
    $region38: #{tpu_custom_call.1} parent=1 // pred_check
      _
    $region39: #{tpu_custom_call.1} parent=1 // pred_check_branch
      %90 = sbr.rel (0) target = $region41
    $region40: #{tpu_custom_call.1} parent=1 // pred_region
      %s92 = ssub.s32 1024, 1024
      %93 = vsyncadd [#allocation12], %s92
      %s94 = sshll.u32 [#allocation11], 4
      %s95 = int_to_ptr.vmem [resolvable:$true] %s94
      %100 = dma.hbm_to_vmem [thread:$0]  %s9, 1024, %s95, [#allocation12], 64, 64, 4
    $region41: #{tpu_custom_call.1} parent=1 // pred_fallthru
      _
    // Predicated region
    $region42: #{tpu_custom_call.1} parent=1 // pred_check
      _
    $region43: #{tpu_custom_call.1} parent=1 // pred_check_branch
      %102 = sbr.rel (0) target = $region45
    $region44: #{tpu_custom_call.1} parent=1 // pred_region
      _
    $region45: #{tpu_custom_call.1} parent=1 // pred_fallthru
      _
    // Predicated region
    $region46: #{tpu_custom_call.1} parent=1 // pred_check
      _
    $region47: #{tpu_custom_call.1} parent=1 // pred_check_branch
      %104 = sbr.rel (0) target = $region49
    $region48: #{tpu_custom_call.1} parent=1 // pred_region
      %105 = dma.done [#allocation3], 256
    $region49: #{tpu_custom_call.1} parent=1 // pred_fallthru
      _
    // Predicated region
    $region50: #{tpu_custom_call.1} parent=1 // pred_check
      _
    $region51: #{tpu_custom_call.1} parent=1 // pred_check_branch
      %107 = sbr.rel (0) target = $region53
    $region52: #{tpu_custom_call.1} parent=1 // pred_region
      %108 = dma.done [#allocation6], 128
    $region53: #{tpu_custom_call.1} parent=1 // pred_fallthru
      _
    // Predicated region
    $region54: #{tpu_custom_call.1} parent=1 // pred_check
      _
    $region55: #{tpu_custom_call.1} parent=1 // pred_check_branch
      %110 = sbr.rel (0) target = $region57
    $region56: #{tpu_custom_call.1} parent=1 // pred_region
      %111 = dma.done [#allocation6], 1024
    $region57: #{tpu_custom_call.1} parent=1 // pred_fallthru
      _
    // Predicated region
    $region58: #{tpu_custom_call.1} parent=1 // pred_check
      _
    $region59: #{tpu_custom_call.1} parent=1 // pred_check_branch
      %113 = sbr.rel (0) target = $region61
    $region60: #{tpu_custom_call.1} parent=1 // pred_region
      %114 = dma.done [#allocation9], 1024
    $region61: #{tpu_custom_call.1} parent=1 // pred_fallthru
      _
    // Predicated region
    $region62: #{tpu_custom_call.1} parent=1 // pred_check
      _
    $region63: #{tpu_custom_call.1} parent=1 // pred_check_branch
      %116 = sbr.rel (0) target = $region65
    $region64: #{tpu_custom_call.1} parent=1 // pred_region
      %117 = dma.done [#allocation9], 1024
    $region65: #{tpu_custom_call.1} parent=1 // pred_fallthru
      _
    // Predicated region
    $region66: #{tpu_custom_call.1} parent=1 // pred_check
      _
    $region67: #{tpu_custom_call.1} parent=1 // pred_check_branch
      %119 = sbr.rel (0) target = $region69
    $region68: #{tpu_custom_call.1} parent=1 // pred_region
      %120 = dma.done [#allocation12], 1024
    $region69: #{tpu_custom_call.1} parent=1 // pred_fallthru
      _
    %v122 = vld [vmem:[#allocation2] sm:$0xff]
    %v123 = vld [vmem:[#allocation2 + $0x8] sm:$0xff]
    %v124 = vld [vmem:[#allocation5] sm:$0xf]
    %v125 = vld [vmem:[#allocation5 + $0x4] sm:$0xf]
    %v126 = vld [vmem:[%s2] sm:$0x1]
    %v127 = vpack.c.bf16 %v123, %v122
    %v129 = vlaneseq
    %v130 = vshrl.u32 %v129, 7
    %v131 = vsub.s32 0, %v130
    %v132 = vrot.slane %v126, %v131
    %v136 = vunpack.c.l.b16 %v124
    %v137 = vunpack.c.l.b16 %v125
    %v138 = vpack.c.b16 %v137, %v136
    %vm140 = vcmask 130048
    %v142 = vsel %vm140, %v127, 0
    %144 = vmatprep.subr.bf16.mxu0 0
    %145 = vmatpush1.bf16.msra.mxu0 %v138
    %146 = vmatprep.subr.bf16.mxu0 0
    %147 = vmatpush1.bf16.msra.mxu0 0
    %148 = vmatprep.subr.bf16.mxu0 0
    %149 = vmatpush1.bf16.msra.mxu0 0
    %150 = vmatprep.subr.bf16.mxu0 0
    %151 = vmatpush1.bf16.msra.mxu0 0
    %152 = vmatprep.subr.bf16.mxu0 0
    %153 = vmatpush1.bf16.msra.mxu0 0
    %154 = vmatprep.subr.bf16.mxu0 0
    %155 = vmatpush1.bf16.msra.mxu0 0
    %156 = vmatprep.subr.bf16.mxu0 0
    %157 = vmatpush1.bf16.msra.mxu0 0
    %158 = vmatprep.subr.bf16.mxu0 0
    %159 = vmatpush1.bf16.msra.mxu0 0
    %160 = vmatprep.subr.bf16.mxu0 0
    %161 = vmatpush1.bf16.msra.mxu0 0
    %162 = vmatprep.subr.bf16.mxu0 0
    %163 = vmatpush1.bf16.msra.mxu0 0
    %164 = vmatprep.subr.bf16.mxu0 0
    %165 = vmatpush1.bf16.msra.mxu0 0
    %166 = vmatprep.subr.bf16.mxu0 0
    %167 = vmatpush1.bf16.msra.mxu0 0
    %168 = vmatprep.subr.bf16.mxu0 0
    %169 = vmatpush1.bf16.msra.mxu0 0
    %170 = vmatprep.subr.bf16.mxu0 0
    %171 = vmatpush1.bf16.msra.mxu0 0
    %172 = vmatprep.subr.bf16.mxu0 0
    %173 = vmatpush1.bf16.msra.mxu0 0
    %174 = vmatprep.subr.bf16.mxu0 0
    %175 = vmatpush1.bf16.msra.mxu0 0
    %176 = vmatprep.mubr.bf16.mxu0 0
    %177 = vmatmul.mubr.bf16.gmra.mrb[0].mxu0 %v142
    %v178 = vpop.f32.mrb[0].mxu0
    %v179 = vadd.f32 %v132, %v178
    %v180 = vpop.f32.mrb[0].mxu0
    %v181 = vpop.f32.mrb[0].mxu0
    %v182 = vadd.f32 %v132, %v181
    %v183 = vpop.f32.mrb[0].mxu0
    %184 = vdwg.mxu0
    %v185 = vmax.f32 %v179, 0.0
    %v186 = vmax.f32 %v182, 0.0
    %v187 = vld [vmem:[#allocation7] sm:$0xf]
    %v188 = vld [vmem:[#allocation7 + $0x4] sm:$0xf]
    %v189 = vld [vmem:[#allocation7 + $0x8] sm:$0xf]
    %v190 = vld [vmem:[#allocation7 + $0xc] sm:$0xf]
    %v191 = vld [vmem:[#allocation7 + $0x10] sm:$0xf]
    %v192 = vld [vmem:[#allocation7 + $0x14] sm:$0xf]
    %v193 = vld [vmem:[#allocation7 + $0x18] sm:$0xf]
    %v194 = vld [vmem:[#allocation7 + $0x1c] sm:$0xf]
    %v195 = vld [vmem:[#allocation7 + $0x20] sm:$0xf]
    %v196 = vld [vmem:[#allocation7 + $0x24] sm:$0xf]
    %v197 = vld [vmem:[#allocation7 + $0x28] sm:$0xf]
    %v198 = vld [vmem:[#allocation7 + $0x2c] sm:$0xf]
    %v199 = vld [vmem:[#allocation7 + $0x30] sm:$0xf]
    %v200 = vld [vmem:[#allocation7 + $0x34] sm:$0xf]
    %v201 = vld [vmem:[#allocation7 + $0x38] sm:$0xf]
    %v202 = vld [vmem:[#allocation7 + $0x3c] sm:$0xf]
    %v203 = vld [vmem:[%s4] sm:$0x1]
    %v204 = vpack.c.bf16 %v186, %v185
    %v206 = vlaneseq
    %v207 = vshrl.u32 %v206, 7
    %v208 = vsub.s32 0, %v207
    %v209 = vrot.slane %v203, %v208
    %v227 = vunpack.c.l.b16 %v187
    %v228 = vunpack.c.l.b16 %v188
    %v229 = vunpack.c.l.b16 %v189
    %v230 = vunpack.c.l.b16 %v190
    %v231 = vunpack.c.l.b16 %v191
    %v232 = vunpack.c.l.b16 %v192
    %v233 = vunpack.c.l.b16 %v193
    %v234 = vunpack.c.l.b16 %v194
    %v235 = vunpack.c.l.b16 %v195
    %v236 = vunpack.c.l.b16 %v196
    %v237 = vunpack.c.l.b16 %v197
    %v238 = vunpack.c.l.b16 %v198
    %v239 = vunpack.c.l.b16 %v199
    %v240 = vunpack.c.l.b16 %v200
    %v241 = vunpack.c.l.b16 %v201
    %v242 = vunpack.c.l.b16 %v202
    %v243 = vpack.c.b16 %v228, %v227
    %v244 = vpack.c.b16 %v230, %v229
    %v245 = vpack.c.b16 %v232, %v231
    %v246 = vpack.c.b16 %v234, %v233
    %v247 = vpack.c.b16 %v236, %v235
    %v248 = vpack.c.b16 %v238, %v237
    %v249 = vpack.c.b16 %v240, %v239
    %v250 = vpack.c.b16 %v242, %v241
    %259 = vmatprep.subr.bf16.mxu0 0
    %260 = vmatpush1.bf16.msra.mxu0 %v243
    %261 = vmatprep.subr.bf16.mxu0 0
    %262 = vmatpush1.bf16.msra.mxu0 %v244
    %263 = vmatprep.subr.bf16.mxu0 0
    %264 = vmatpush1.bf16.msra.mxu0 %v245
    %265 = vmatprep.subr.bf16.mxu0 0
    %266 = vmatpush1.bf16.msra.mxu0 %v246
    %267 = vmatprep.subr.bf16.mxu0 0
    %268 = vmatpush1.bf16.msra.mxu0 %v247
    %269 = vmatprep.subr.bf16.mxu0 0
    %270 = vmatpush1.bf16.msra.mxu0 %v248
    %271 = vmatprep.subr.bf16.mxu0 0
    %272 = vmatpush1.bf16.msra.mxu0 %v249
    %273 = vmatprep.subr.bf16.mxu0 0
    %274 = vmatpush1.bf16.msra.mxu0 %v250
    %275 = vmatprep.subr.bf16.mxu0 0
    %276 = vmatpush1.bf16.msra.mxu0 0
    %277 = vmatprep.subr.bf16.mxu0 0
    %278 = vmatpush1.bf16.msra.mxu0 0
    %279 = vmatprep.subr.bf16.mxu0 0
    %280 = vmatpush1.bf16.msra.mxu0 0
    %281 = vmatprep.subr.bf16.mxu0 0
    %282 = vmatpush1.bf16.msra.mxu0 0
    %283 = vmatprep.subr.bf16.mxu0 0
    %284 = vmatpush1.bf16.msra.mxu0 0
    %285 = vmatprep.subr.bf16.mxu0 0
    %286 = vmatpush1.bf16.msra.mxu0 0
    %287 = vmatprep.subr.bf16.mxu0 0
    %288 = vmatpush1.bf16.msra.mxu0 0
    %289 = vmatprep.subr.bf16.mxu0 0
    %290 = vmatpush1.bf16.msra.mxu0 0
    %291 = vmatprep.mubr.bf16.mxu0 0
    %292 = vmatmul.mubr.bf16.gmra.mrb[0].mxu0 %v204
    %v293 = vpop.f32.mrb[0].mxu0
    %v294 = vadd.f32 %v209, %v293
    %v295 = vpop.f32.mrb[0].mxu0
    %v296 = vpop.f32.mrb[0].mxu0
    %v297 = vadd.f32 %v209, %v296
    %v298 = vpop.f32.mrb[0].mxu0
    %299 = vdwg.mxu0
    %v300 = vmax.f32 %v294, 0.0
    %v301 = vmax.f32 %v297, 0.0
    %v302 = vld [vmem:[#allocation8] sm:$0xf]
    %v303 = vld [vmem:[#allocation8 + $0x4] sm:$0xf]
    %v304 = vld [vmem:[#allocation8 + $0x8] sm:$0xf]
    %v305 = vld [vmem:[#allocation8 + $0xc] sm:$0xf]
    %v306 = vld [vmem:[#allocation8 + $0x10] sm:$0xf]
    %v307 = vld [vmem:[#allocation8 + $0x14] sm:$0xf]
    %v308 = vld [vmem:[#allocation8 + $0x18] sm:$0xf]
    %v309 = vld [vmem:[#allocation8 + $0x1c] sm:$0xf]
    %v310 = vld [vmem:[#allocation8 + $0x20] sm:$0xf]
    %v311 = vld [vmem:[#allocation8 + $0x24] sm:$0xf]
    %v312 = vld [vmem:[#allocation8 + $0x28] sm:$0xf]
    %v313 = vld [vmem:[#allocation8 + $0x2c] sm:$0xf]
    %v314 = vld [vmem:[#allocation8 + $0x30] sm:$0xf]
    %v315 = vld [vmem:[#allocation8 + $0x34] sm:$0xf]
    %v316 = vld [vmem:[#allocation8 + $0x38] sm:$0xf]
    %v317 = vld [vmem:[#allocation8 + $0x3c] sm:$0xf]
    %v318 = vld [vmem:[%s6] sm:$0x1]
    %v319 = vpack.c.bf16 %v301, %v300
    %v321 = vlaneseq
    %v322 = vshrl.u32 %v321, 7
    %v323 = vsub.s32 0, %v322
    %v324 = vrot.slane %v318, %v323
    %v342 = vunpack.c.l.b16 %v302
    %v343 = vunpack.c.l.b16 %v303
    %v344 = vunpack.c.l.b16 %v304
    %v345 = vunpack.c.l.b16 %v305
    %v346 = vunpack.c.l.b16 %v306
    %v347 = vunpack.c.l.b16 %v307
    %v348 = vunpack.c.l.b16 %v308
    %v349 = vunpack.c.l.b16 %v309
    %v350 = vunpack.c.l.b16 %v310
    %v351 = vunpack.c.l.b16 %v311
    %v352 = vunpack.c.l.b16 %v312
    %v353 = vunpack.c.l.b16 %v313
    %v354 = vunpack.c.l.b16 %v314
    %v355 = vunpack.c.l.b16 %v315
    %v356 = vunpack.c.l.b16 %v316
    %v357 = vunpack.c.l.b16 %v317
    %v358 = vpack.c.b16 %v343, %v342
    %v359 = vpack.c.b16 %v345, %v344
    %v360 = vpack.c.b16 %v347, %v346
    %v361 = vpack.c.b16 %v349, %v348
    %v362 = vpack.c.b16 %v351, %v350
    %v363 = vpack.c.b16 %v353, %v352
    %v364 = vpack.c.b16 %v355, %v354
    %v365 = vpack.c.b16 %v357, %v356
    %374 = vmatprep.subr.bf16.mxu0 0
    %375 = vmatpush1.bf16.msra.mxu0 %v358
    %376 = vmatprep.subr.bf16.mxu0 0
    %377 = vmatpush1.bf16.msra.mxu0 %v359
    %378 = vmatprep.subr.bf16.mxu0 0
    %379 = vmatpush1.bf16.msra.mxu0 %v360
    %380 = vmatprep.subr.bf16.mxu0 0
    %381 = vmatpush1.bf16.msra.mxu0 %v361
    %382 = vmatprep.subr.bf16.mxu0 0
    %383 = vmatpush1.bf16.msra.mxu0 %v362
    %384 = vmatprep.subr.bf16.mxu0 0
    %385 = vmatpush1.bf16.msra.mxu0 %v363
    %386 = vmatprep.subr.bf16.mxu0 0
    %387 = vmatpush1.bf16.msra.mxu0 %v364
    %388 = vmatprep.subr.bf16.mxu0 0
    %389 = vmatpush1.bf16.msra.mxu0 %v365
    %390 = vmatprep.subr.bf16.mxu0 0
    %391 = vmatpush1.bf16.msra.mxu0 0
    %392 = vmatprep.subr.bf16.mxu0 0
    %393 = vmatpush1.bf16.msra.mxu0 0
    %394 = vmatprep.subr.bf16.mxu0 0
    %395 = vmatpush1.bf16.msra.mxu0 0
    %396 = vmatprep.subr.bf16.mxu0 0
    %397 = vmatpush1.bf16.msra.mxu0 0
    %398 = vmatprep.subr.bf16.mxu0 0
    %399 = vmatpush1.bf16.msra.mxu0 0
    %400 = vmatprep.subr.bf16.mxu0 0
    %401 = vmatpush1.bf16.msra.mxu0 0
    %402 = vmatprep.subr.bf16.mxu0 0
    %403 = vmatpush1.bf16.msra.mxu0 0
    %404 = vmatprep.subr.bf16.mxu0 0
    %405 = vmatpush1.bf16.msra.mxu0 0
    %406 = vmatprep.mubr.bf16.mxu0 0
    %407 = vmatmul.mubr.bf16.gmra.mrb[0].mxu0 %v319
    %v408 = vpop.f32.mrb[0].mxu0
    %v409 = vadd.f32 %v324, %v408
    %v410 = vpop.f32.mrb[0].mxu0
    %v411 = vpop.f32.mrb[0].mxu0
    %v412 = vadd.f32 %v324, %v411
    %v413 = vpop.f32.mrb[0].mxu0
    %414 = vdwg.mxu0
    %v415 = vmax.f32 %v409, 0.0
    %v416 = vmax.f32 %v412, 0.0
    %v417 = vld [vmem:[#allocation10] sm:$0xf]
    %v418 = vld [vmem:[#allocation10 + $0x4] sm:$0xf]
    %v419 = vld [vmem:[#allocation10 + $0x8] sm:$0xf]
    %v420 = vld [vmem:[#allocation10 + $0xc] sm:$0xf]
    %v421 = vld [vmem:[#allocation10 + $0x10] sm:$0xf]
    %v422 = vld [vmem:[#allocation10 + $0x14] sm:$0xf]
    %v423 = vld [vmem:[#allocation10 + $0x18] sm:$0xf]
    %v424 = vld [vmem:[#allocation10 + $0x1c] sm:$0xf]
    %v425 = vld [vmem:[#allocation10 + $0x20] sm:$0xf]
    %v426 = vld [vmem:[#allocation10 + $0x24] sm:$0xf]
    %v427 = vld [vmem:[#allocation10 + $0x28] sm:$0xf]
    %v428 = vld [vmem:[#allocation10 + $0x2c] sm:$0xf]
    %v429 = vld [vmem:[#allocation10 + $0x30] sm:$0xf]
    %v430 = vld [vmem:[#allocation10 + $0x34] sm:$0xf]
    %v431 = vld [vmem:[#allocation10 + $0x38] sm:$0xf]
    %v432 = vld [vmem:[#allocation10 + $0x3c] sm:$0xf]
    %v433 = vld [vmem:[%s8] sm:$0x1]
    %v434 = vpack.c.bf16 %v416, %v415
    %v436 = vlaneseq
    %v437 = vshrl.u32 %v436, 7
    %v438 = vsub.s32 0, %v437
    %v439 = vrot.slane %v433, %v438
    %v457 = vunpack.c.l.b16 %v417
    %v458 = vunpack.c.l.b16 %v418
    %v459 = vunpack.c.l.b16 %v419
    %v460 = vunpack.c.l.b16 %v420
    %v461 = vunpack.c.l.b16 %v421
    %v462 = vunpack.c.l.b16 %v422
    %v463 = vunpack.c.l.b16 %v423
    %v464 = vunpack.c.l.b16 %v424
    %v465 = vunpack.c.l.b16 %v425
    %v466 = vunpack.c.l.b16 %v426
    %v467 = vunpack.c.l.b16 %v427
    %v468 = vunpack.c.l.b16 %v428
    %v469 = vunpack.c.l.b16 %v429
    %v470 = vunpack.c.l.b16 %v430
    %v471 = vunpack.c.l.b16 %v431
    %v472 = vunpack.c.l.b16 %v432
    %v473 = vpack.c.b16 %v458, %v457
    %v474 = vpack.c.b16 %v460, %v459
    %v475 = vpack.c.b16 %v462, %v461
    %v476 = vpack.c.b16 %v464, %v463
    %v477 = vpack.c.b16 %v466, %v465
    %v478 = vpack.c.b16 %v468, %v467
    %v479 = vpack.c.b16 %v470, %v469
    %v480 = vpack.c.b16 %v472, %v471
    %489 = vmatprep.subr.bf16.mxu0 0
    %490 = vmatpush1.bf16.msra.mxu0 %v473
    %491 = vmatprep.subr.bf16.mxu0 0
    %492 = vmatpush1.bf16.msra.mxu0 %v474
    %493 = vmatprep.subr.bf16.mxu0 0
    %494 = vmatpush1.bf16.msra.mxu0 %v475
    %495 = vmatprep.subr.bf16.mxu0 0
    %496 = vmatpush1.bf16.msra.mxu0 %v476
    %497 = vmatprep.subr.bf16.mxu0 0
    %498 = vmatpush1.bf16.msra.mxu0 %v477
    %499 = vmatprep.subr.bf16.mxu0 0
    %500 = vmatpush1.bf16.msra.mxu0 %v478
    %501 = vmatprep.subr.bf16.mxu0 0
    %502 = vmatpush1.bf16.msra.mxu0 %v479
    %503 = vmatprep.subr.bf16.mxu0 0
    %504 = vmatpush1.bf16.msra.mxu0 %v480
    %505 = vmatprep.subr.bf16.mxu0 0
    %506 = vmatpush1.bf16.msra.mxu0 0
    %507 = vmatprep.subr.bf16.mxu0 0
    %508 = vmatpush1.bf16.msra.mxu0 0
    %509 = vmatprep.subr.bf16.mxu0 0
    %510 = vmatpush1.bf16.msra.mxu0 0
    %511 = vmatprep.subr.bf16.mxu0 0
    %512 = vmatpush1.bf16.msra.mxu0 0
    %513 = vmatprep.subr.bf16.mxu0 0
    %514 = vmatpush1.bf16.msra.mxu0 0
    %515 = vmatprep.subr.bf16.mxu0 0
    %516 = vmatpush1.bf16.msra.mxu0 0
    %517 = vmatprep.subr.bf16.mxu0 0
    %518 = vmatpush1.bf16.msra.mxu0 0
    %519 = vmatprep.subr.bf16.mxu0 0
    %520 = vmatpush1.bf16.msra.mxu0 0
    %521 = vmatprep.mubr.bf16.mxu0 0
    %522 = vmatmul.mubr.bf16.gmra.mrb[0].mxu0 %v434
    %v523 = vpop.f32.mrb[0].mxu0
    %v524 = vadd.f32 %v439, %v523
    %v525 = vpop.f32.mrb[0].mxu0
    %v526 = vpop.f32.mrb[0].mxu0
    %v527 = vadd.f32 %v439, %v526
    %v528 = vpop.f32.mrb[0].mxu0
    %529 = vdwg.mxu0
    %v530 = vmax.f32 %v524, 0.0
    %v531 = vmax.f32 %v527, 0.0
    %v532 = vld [vmem:[#allocation11] sm:$0xf]
    %v533 = vld [vmem:[#allocation11 + $0x4] sm:$0xf]
    %v534 = vld [vmem:[#allocation11 + $0x8] sm:$0xf]
    %v535 = vld [vmem:[#allocation11 + $0xc] sm:$0xf]
    %v536 = vld [vmem:[#allocation11 + $0x10] sm:$0xf]
    %v537 = vld [vmem:[#allocation11 + $0x14] sm:$0xf]
    %v538 = vld [vmem:[#allocation11 + $0x18] sm:$0xf]
    %v539 = vld [vmem:[#allocation11 + $0x1c] sm:$0xf]
    %v540 = vld [vmem:[#allocation11 + $0x20] sm:$0xf]
    %v541 = vld [vmem:[#allocation11 + $0x24] sm:$0xf]
    %v542 = vld [vmem:[#allocation11 + $0x28] sm:$0xf]
    %v543 = vld [vmem:[#allocation11 + $0x2c] sm:$0xf]
    %v544 = vld [vmem:[#allocation11 + $0x30] sm:$0xf]
    %v545 = vld [vmem:[#allocation11 + $0x34] sm:$0xf]
    %v546 = vld [vmem:[#allocation11 + $0x38] sm:$0xf]
    %v547 = vld [vmem:[#allocation11 + $0x3c] sm:$0xf]
    %v548 = vld [vmem:[%s10] sm:$0x1]
    %v549 = vpack.c.bf16 %v531, %v530
    %v551 = vlaneseq
    %v552 = vshrl.u32 %v551, 7
    %v553 = vsub.s32 0, %v552
    %v554 = vrot.slane %v548, %v553
    %v572 = vunpack.c.l.b16 %v532
    %v573 = vunpack.c.l.b16 %v533
    %v574 = vunpack.c.l.b16 %v534
    %v575 = vunpack.c.l.b16 %v535
    %v576 = vunpack.c.l.b16 %v536
    %v577 = vunpack.c.l.b16 %v537
    %v578 = vunpack.c.l.b16 %v538
    %v579 = vunpack.c.l.b16 %v539
    %v580 = vunpack.c.l.b16 %v540
    %v581 = vunpack.c.l.b16 %v541
    %v582 = vunpack.c.l.b16 %v542
    %v583 = vunpack.c.l.b16 %v543
    %v584 = vunpack.c.l.b16 %v544
    %v585 = vunpack.c.l.b16 %v545
    %v586 = vunpack.c.l.b16 %v546
    %v587 = vunpack.c.l.b16 %v547
    %v588 = vpack.c.b16 %v573, %v572
    %v589 = vpack.c.b16 %v575, %v574
    %v590 = vpack.c.b16 %v577, %v576
    %v591 = vpack.c.b16 %v579, %v578
    %v592 = vpack.c.b16 %v581, %v580
    %v593 = vpack.c.b16 %v583, %v582
    %v594 = vpack.c.b16 %v585, %v584
    %v595 = vpack.c.b16 %v587, %v586
    %604 = vmatprep.subr.bf16.mxu0 0
    %605 = vmatpush1.bf16.msra.mxu0 %v588
    %606 = vmatprep.subr.bf16.mxu0 0
    %607 = vmatpush1.bf16.msra.mxu0 %v589
    %608 = vmatprep.subr.bf16.mxu0 0
    %609 = vmatpush1.bf16.msra.mxu0 %v590
    %610 = vmatprep.subr.bf16.mxu0 0
    %611 = vmatpush1.bf16.msra.mxu0 %v591
    %612 = vmatprep.subr.bf16.mxu0 0
    %613 = vmatpush1.bf16.msra.mxu0 %v592
    %614 = vmatprep.subr.bf16.mxu0 0
    %615 = vmatpush1.bf16.msra.mxu0 %v593
    %616 = vmatprep.subr.bf16.mxu0 0
    %617 = vmatpush1.bf16.msra.mxu0 %v594
    %618 = vmatprep.subr.bf16.mxu0 0
    %619 = vmatpush1.bf16.msra.mxu0 %v595
    %620 = vmatprep.subr.bf16.mxu0 0
    %621 = vmatpush1.bf16.msra.mxu0 0
    %622 = vmatprep.subr.bf16.mxu0 0
    %623 = vmatpush1.bf16.msra.mxu0 0
    %624 = vmatprep.subr.bf16.mxu0 0
    %625 = vmatpush1.bf16.msra.mxu0 0
    %626 = vmatprep.subr.bf16.mxu0 0
    %627 = vmatpush1.bf16.msra.mxu0 0
    %628 = vmatprep.subr.bf16.mxu0 0
    %629 = vmatpush1.bf16.msra.mxu0 0
    %630 = vmatprep.subr.bf16.mxu0 0
    %631 = vmatpush1.bf16.msra.mxu0 0
    %632 = vmatprep.subr.bf16.mxu0 0
    %633 = vmatpush1.bf16.msra.mxu0 0
    %634 = vmatprep.subr.bf16.mxu0 0
    %635 = vmatpush1.bf16.msra.mxu0 0
    %636 = vmatprep.mubr.bf16.mxu0 0
    %637 = vmatmul.mubr.bf16.gmra.mrb[0].mxu0 %v549
    %v638 = vpop.f32.mrb[0].mxu0
    %v639 = vadd.f32 %v554, %v638
    %v640 = vpop.f32.mrb[0].mxu0
    %v641 = vpop.f32.mrb[0].mxu0
    %v642 = vadd.f32 %v554, %v641
    %v643 = vpop.f32.mrb[0].mxu0
    %644 = vdwg.mxu0
    %645 = vst [vmem:[#allocation13] sm:$0xff] %v639
    %646 = vst [vmem:[#allocation13 + $0x8] sm:$0xff] %v642
    // Predicated region
    $region70: #{tpu_custom_call.1} parent=1 // pred_check
      _
    $region71: #{tpu_custom_call.1} parent=1 // pred_check_branch
      %648 = sbr.rel (0) target = $region73
    $region72: #{tpu_custom_call.1} parent=1 // pred_region
      %s650 = ssub.s32 256, 256
      %651 = vsyncadd [#allocation4], %s650
      %s652 = sshll.u32 [#allocation13], 4
      %s653 = int_to_ptr.vmem [resolvable:$true] %s652
      %658 = dma.vmem_to_hbm [thread:$0]  %s653, 256, %s11, [#allocation4], 128, 128, 8
    $region73: #{tpu_custom_call.1} parent=1 // pred_fallthru
      _
    // Predicated region
    $region74: #{tpu_custom_call.1} parent=1 // pred_check
      _
    $region75: #{tpu_custom_call.1} parent=1 // pred_check_branch
      %660 = sbr.rel (0) target = $region77
    $region76: #{tpu_custom_call.1} parent=1 // pred_region
      %661 = dma.done [#allocation4], 256
    $region77: #{tpu_custom_call.1} parent=1 // pred_fallthru
      _
    %662 = vsyncpa [#allocation3], 1
    %663 = vsyncpa [#allocation6], 1
    %664 = vsyncpa [#allocation9], 1
    %665 = vsyncpa [#allocation12], 1
    %666 = vsyncpa [#allocation4], 1

</llo_original>
